<compile_context>
chip_gen: v7x
topology: tpu7x:2x2x1
jax: 0.10.0
libtpu: 0.0.40
codegen_flags: <defaults>
</compile_context>

<pallas_src>
import jax
import jax.numpy as jnp
from jax.experimental import pallas as pl
from jax.experimental.pallas import tpu as pltpu

K = 3  # ConvTranspose2d kernel size
# Conv-transpose output positions kept by the slice [:, :, 1:4:2, 2:4].
_OUT_POSITIONS = ((1, 2), (1, 3), (3, 2), (3, 3))


def _fused_convt_slice_kernel(x_ref, w_ref, b_ref, o_ref):
    """x_ref: (16, TN) f32 — flattened 4x4 corner on sublanes, batch on lanes.
       w_ref: (3, 3)   f32 un-flipped ConvTranspose2d weight (SMEM).
       b_ref: (1, 1)   f32 bias (SMEM).
       o_ref: (4, TN)  f32 — rows are y(1,2), y(1,3), y(3,2), y(3,3)."""
    tn = x_ref.shape[1]
    bias = b_ref[0, 0]

    row_cache = {}

    def corner_row(r, c):
        # (1, TN) lane-dense row of the 4x4 corner, loaded at most once.
        idx = r * 4 + c
        if idx not in row_cache:
            row_cache[idx] = x_ref[idx:idx + 1, :]
        return row_cache[idx]

    outs = []
    for oh, ow in _OUT_POSITIONS:
        # Bias folded into the accumulator init (no extra add per row).
        acc = jnp.full((1, tn), bias, jnp.float32)
        # conv_t: y[oh, ow] = b + sum_{ki,kj} x[oh+ki-2, ow+kj-2] * w[2-ki, 2-kj]
        # (out-of-range x == implicit zero pad -> tap skipped at trace time).
        for ki in range(K):
            for kj in range(K):
                r = oh + ki - 2
                c = ow + kj - 2
                if 0 <= r < 4 and 0 <= c < 4:
                    acc = acc + corner_row(r, c) * w_ref[K - 1 - ki, K - 1 - kj]
        outs.append(acc)

    # Single full-block, lane-dense, unmasked store.
    o_ref[...] = jnp.concatenate(outs, axis=0)


@jax.jit
def model_forward(x_nchw, weight, bias):
    """x_nchw: (N, 1, H, W); weight: (1, 1, 3, 3); bias: (1,).
       Returns ConvTranspose2d(1,1,3)(x)[:, :, 1:4:2, 2:4] -> (N, 1, 2, 2)."""
    N, C, H, W = x_nchw.shape
    assert C == 1
    # TODO(synk): fused window assumes H, W >= 4 (true for the spec's inputs);
    # smaller spatial sizes would need extra zero-tap handling.
    assert H >= 4 and W >= 4

    # Gather only the 4x4 corner, cast only that tiny slab, put batch on lanes.
    corner = x_nchw[:, 0, :4, :4].astype(jnp.float32)          # (N, 4, 4)
    slab = corner.reshape(N, 16).T                             # (16, N)

    # Lane tiling over the batch: TN lanes per grid step (min 128, cap 512).
    TN = min(512, 128 * pl.cdiv(N, 128))
    n_pad = pl.cdiv(N, TN) * TN
    if n_pad != N:
        slab = jnp.pad(slab, ((0, 0), (0, n_pad - N)))

    w2d = weight.reshape(K, K).astype(jnp.float32)
    b2d = bias.reshape(1, 1).astype(jnp.float32)

    out_slab = pl.pallas_call(
        _fused_convt_slice_kernel,
        out_shape=jax.ShapeDtypeStruct((4, n_pad), jnp.float32),
        grid=(n_pad // TN,),
        in_specs=[
            pl.BlockSpec((16, TN), lambda i: (0, i)),
            pl.BlockSpec(memory_space=pltpu.MemorySpace.SMEM),
            pl.BlockSpec(memory_space=pltpu.MemorySpace.SMEM),
        ],
        out_specs=pl.BlockSpec((4, TN), lambda i: (0, i)),
        compiler_params=pltpu.CompilerParams(
            dimension_semantics=("parallel",)),
    )(slab, w2d, b2d)

    # (4, N) -> (N, 1, 2, 2); row/col order matches [:, :, 1:4:2, 2:4].
    return out_slab[:, :N].T.reshape(N, 1, 2, 2)


def _reference_forward(x_nchw, weight, bias):
    """Pure-JAX reference: full ConvTranspose2d (pad + flipped correlation),
       then the [:, :, 1:4:2, 2:4] slice."""
    N, _, H, W = x_nchw.shape
    x_pad = jnp.pad(x_nchw.reshape(N, H, W).astype(jnp.float32),
                    ((0, 0), (K - 1, K - 1), (K - 1, K - 1)))
    w_flip = weight.reshape(K, K)[::-1, ::-1]
    Ho, Wo = H + K - 1, W + K - 1
    out = jnp.zeros((N, Ho, Wo), jnp.float32)
    for ki in range(K):
        for kj in range(K):
            out = out + x_pad[:, ki:ki + Ho, kj:kj + Wo] * w_flip[ki, kj]
    out = out + bias[0]
    return out.reshape(N, 1, Ho, Wo)[:, :, 1:4:2, 2:4]


if __name__ == "__main__":
    key = jax.random.PRNGKey(0)
    kx, kw, kb = jax.random.split(key, 3)

    # Input: N=2, C=1 (required by ConvTranspose2d(1,1,3)), 16x16 spatial.
    x = jax.random.normal(kx, (2, 1, 16, 16), dtype=jnp.float32)

    # Deterministic parameter init, mirroring PyTorch's uniform(-b, b),
    # b = 1/sqrt(fan_in), fan_in = 1*3*3.
    bound = 1.0 / (1 * K * K) ** 0.5
    weight = jax.random.uniform(kw, (1, 1, K, K), jnp.float32, -bound, bound)
    bias = jax.random.uniform(kb, (1,), jnp.float32, -bound, bound)

    out = model_forward(x, weight, bias)
    out = jax.block_until_ready(out)

    ref = _reference_forward(x, weight, bias)
    assert out.shape == (2, 1, 2, 2), out.shape
    assert jnp.allclose(out, ref, atol=1e-5, rtol=1e-5)

    print("KERNEL_OK")
</pallas_src>

<mosaic_0001>
module attributes {stable_mosaic.version = 11 : i64} {
  func.func @_fused_convt_slice_kernel(%arg0: i32, %arg1: memref<16x128xf32, #tpu.memory_space<vmem>>, %arg2: memref<3x3xf32, #tpu.memory_space<smem>>, %arg3: memref<1x1xf32, #tpu.memory_space<smem>>, %arg4: memref<4x128xf32, #tpu.memory_space<vmem>>) attributes {dimension_semantics = [#tpu.dimension_semantics<parallel>], iteration_bounds = array<i64: 1>, scalar_prefetch = 0 : i64, scratch_operands = 0 : i64, tpu.core_type = #tpu.core_type<tc>, window_params = [{transform_indices = @transform_0, window_bounds = array<i64: 16, 128>}, {transform_indices = @transform_1, window_bounds = array<i64: 3, 3>}, {transform_indices = @transform_2, window_bounds = array<i64: 1, 1>}, {transform_indices = @transform_3, window_bounds = array<i64: 4, 128>}]} {
    %c0 = arith.constant 0 : index
    %c0_0 = arith.constant 0 : index
    %0 = memref.load %arg3[%c0, %c0_0] : memref<1x1xf32, #tpu.memory_space<smem>>
    %1 = vector.broadcast %0 : f32 to vector<1x128xf32>
    %c0_1 = arith.constant 0 : index
    %c0_2 = arith.constant 0 : index
    %2 = vector.load %arg1[%c0_1, %c0_2] : memref<16x128xf32, #tpu.memory_space<vmem>>, vector<1x128xf32>
    %c1 = arith.constant 1 : index
    %c2 = arith.constant 2 : index
    %3 = memref.load %arg2[%c1, %c2] : memref<3x3xf32, #tpu.memory_space<smem>>
    %4 = vector.broadcast %3 : f32 to vector<1x128xf32>
    %5 = arith.mulf %2, %4 : vector<1x128xf32>
    %6 = arith.addf %1, %5 : vector<1x128xf32>
    %c1_3 = arith.constant 1 : index
    %c0_4 = arith.constant 0 : index
    %7 = vector.load %arg1[%c1_3, %c0_4] : memref<16x128xf32, #tpu.memory_space<vmem>>, vector<1x128xf32>
    %c1_5 = arith.constant 1 : index
    %c1_6 = arith.constant 1 : index
    %8 = memref.load %arg2[%c1_5, %c1_6] : memref<3x3xf32, #tpu.memory_space<smem>>
    %9 = vector.broadcast %8 : f32 to vector<1x128xf32>
    %10 = arith.mulf %7, %9 : vector<1x128xf32>
    %11 = arith.addf %6, %10 : vector<1x128xf32>
    %c2_7 = arith.constant 2 : index
    %c0_8 = arith.constant 0 : index
    %12 = vector.load %arg1[%c2_7, %c0_8] : memref<16x128xf32, #tpu.memory_space<vmem>>, vector<1x128xf32>
    %c1_9 = arith.constant 1 : index
    %c0_10 = arith.constant 0 : index
    %13 = memref.load %arg2[%c1_9, %c0_10] : memref<3x3xf32, #tpu.memory_space<smem>>
    %14 = vector.broadcast %13 : f32 to vector<1x128xf32>
    %15 = arith.mulf %12, %14 : vector<1x128xf32>
    %16 = arith.addf %11, %15 : vector<1x128xf32>
    %c4 = arith.constant 4 : index
    %c0_11 = arith.constant 0 : index
    %17 = vector.load %arg1[%c4, %c0_11] : memref<16x128xf32, #tpu.memory_space<vmem>>, vector<1x128xf32>
    %c0_12 = arith.constant 0 : index
    %c2_13 = arith.constant 2 : index
    %18 = memref.load %arg2[%c0_12, %c2_13] : memref<3x3xf32, #tpu.memory_space<smem>>
    %19 = vector.broadcast %18 : f32 to vector<1x128xf32>
    %20 = arith.mulf %17, %19 : vector<1x128xf32>
    %21 = arith.addf %16, %20 : vector<1x128xf32>
    %c5 = arith.constant 5 : index
    %c0_14 = arith.constant 0 : index
    %22 = vector.load %arg1[%c5, %c0_14] : memref<16x128xf32, #tpu.memory_space<vmem>>, vector<1x128xf32>
    %c0_15 = arith.constant 0 : index
    %c1_16 = arith.constant 1 : index
    %23 = memref.load %arg2[%c0_15, %c1_16] : memref<3x3xf32, #tpu.memory_space<smem>>
    %24 = vector.broadcast %23 : f32 to vector<1x128xf32>
    %25 = arith.mulf %22, %24 : vector<1x128xf32>
    %26 = arith.addf %21, %25 : vector<1x128xf32>
    %c6 = arith.constant 6 : index
    %c0_17 = arith.constant 0 : index
    %27 = vector.load %arg1[%c6, %c0_17] : memref<16x128xf32, #tpu.memory_space<vmem>>, vector<1x128xf32>
    %c0_18 = arith.constant 0 : index
    %c0_19 = arith.constant 0 : index
    %28 = memref.load %arg2[%c0_18, %c0_19] : memref<3x3xf32, #tpu.memory_space<smem>>
    %29 = vector.broadcast %28 : f32 to vector<1x128xf32>
    %30 = arith.mulf %27, %29 : vector<1x128xf32>
    %31 = arith.addf %26, %30 : vector<1x128xf32>
    %32 = vector.broadcast %0 : f32 to vector<1x128xf32>
    %c1_20 = arith.constant 1 : index
    %c2_21 = arith.constant 2 : index
    %33 = memref.load %arg2[%c1_20, %c2_21] : memref<3x3xf32, #tpu.memory_space<smem>>
    %34 = vector.broadcast %33 : f32 to vector<1x128xf32>
    %35 = arith.mulf %7, %34 : vector<1x128xf32>
    %36 = arith.addf %32, %35 : vector<1x128xf32>
    %c1_22 = arith.constant 1 : index
    %c1_23 = arith.constant 1 : index
    %37 = memref.load %arg2[%c1_22, %c1_23] : memref<3x3xf32, #tpu.memory_space<smem>>
    %38 = vector.broadcast %37 : f32 to vector<1x128xf32>
    %39 = arith.mulf %12, %38 : vector<1x128xf32>
    %40 = arith.addf %36, %39 : vector<1x128xf32>
    %c3 = arith.constant 3 : index
    %c0_24 = arith.constant 0 : index
    %41 = vector.load %arg1[%c3, %c0_24] : memref<16x128xf32, #tpu.memory_space<vmem>>, vector<1x128xf32>
    %c1_25 = arith.constant 1 : index
    %c0_26 = arith.constant 0 : index
    %42 = memref.load %arg2[%c1_25, %c0_26] : memref<3x3xf32, #tpu.memory_space<smem>>
    %43 = vector.broadcast %42 : f32 to vector<1x128xf32>
    %44 = arith.mulf %41, %43 : vector<1x128xf32>
    %45 = arith.addf %40, %44 : vector<1x128xf32>
    %c0_27 = arith.constant 0 : index
    %c2_28 = arith.constant 2 : index
    %46 = memref.load %arg2[%c0_27, %c2_28] : memref<3x3xf32, #tpu.memory_space<smem>>
    %47 = vector.broadcast %46 : f32 to vector<1x128xf32>
    %48 = arith.mulf %22, %47 : vector<1x128xf32>
    %49 = arith.addf %45, %48 : vector<1x128xf32>
    %c0_29 = arith.constant 0 : index
    %c1_30 = arith.constant 1 : index
    %50 = memref.load %arg2[%c0_29, %c1_30] : memref<3x3xf32, #tpu.memory_space<smem>>
    %51 = vector.broadcast %50 : f32 to vector<1x128xf32>
    %52 = arith.mulf %27, %51 : vector<1x128xf32>
    %53 = arith.addf %49, %52 : vector<1x128xf32>
    %c7 = arith.constant 7 : index
    %c0_31 = arith.constant 0 : index
    %54 = vector.load %arg1[%c7, %c0_31] : memref<16x128xf32, #tpu.memory_space<vmem>>, vector<1x128xf32>
    %c0_32 = arith.constant 0 : index
    %c0_33 = arith.constant 0 : index
    %55 = memref.load %arg2[%c0_32, %c0_33] : memref<3x3xf32, #tpu.memory_space<smem>>
    %56 = vector.broadcast %55 : f32 to vector<1x128xf32>
    %57 = arith.mulf %54, %56 : vector<1x128xf32>
    %58 = arith.addf %53, %57 : vector<1x128xf32>
    %59 = vector.broadcast %0 : f32 to vector<1x128xf32>
    %c2_34 = arith.constant 2 : index
    %c2_35 = arith.constant 2 : index
    %60 = memref.load %arg2[%c2_34, %c2_35] : memref<3x3xf32, #tpu.memory_space<smem>>
    %61 = vector.broadcast %60 : f32 to vector<1x128xf32>
    %62 = arith.mulf %17, %61 : vector<1x128xf32>
    %63 = arith.addf %59, %62 : vector<1x128xf32>
    %c2_36 = arith.constant 2 : index
    %c1_37 = arith.constant 1 : index
    %64 = memref.load %arg2[%c2_36, %c1_37] : memref<3x3xf32, #tpu.memory_space<smem>>
    %65 = vector.broadcast %64 : f32 to vector<1x128xf32>
    %66 = arith.mulf %22, %65 : vector<1x128xf32>
    %67 = arith.addf %63, %66 : vector<1x128xf32>
    %c2_38 = arith.constant 2 : index
    %c0_39 = arith.constant 0 : index
    %68 = memref.load %arg2[%c2_38, %c0_39] : memref<3x3xf32, #tpu.memory_space<smem>>
    %69 = vector.broadcast %68 : f32 to vector<1x128xf32>
    %70 = arith.mulf %27, %69 : vector<1x128xf32>
    %71 = arith.addf %67, %70 : vector<1x128xf32>
    %c8 = arith.constant 8 : index
    %c0_40 = arith.constant 0 : index
    %72 = vector.load %arg1[%c8, %c0_40] : memref<16x128xf32, #tpu.memory_space<vmem>>, vector<1x128xf32>
    %c1_41 = arith.constant 1 : index
    %c2_42 = arith.constant 2 : index
    %73 = memref.load %arg2[%c1_41, %c2_42] : memref<3x3xf32, #tpu.memory_space<smem>>
    %74 = vector.broadcast %73 : f32 to vector<1x128xf32>
    %75 = arith.mulf %72, %74 : vector<1x128xf32>
    %76 = arith.addf %71, %75 : vector<1x128xf32>
    %c9 = arith.constant 9 : index
    %c0_43 = arith.constant 0 : index
    %77 = vector.load %arg1[%c9, %c0_43] : memref<16x128xf32, #tpu.memory_space<vmem>>, vector<1x128xf32>
    %c1_44 = arith.constant 1 : index
    %c1_45 = arith.constant 1 : index
    %78 = memref.load %arg2[%c1_44, %c1_45] : memref<3x3xf32, #tpu.memory_space<smem>>
    %79 = vector.broadcast %78 : f32 to vector<1x128xf32>
    %80 = arith.mulf %77, %79 : vector<1x128xf32>
    %81 = arith.addf %76, %80 : vector<1x128xf32>
    %c10 = arith.constant 10 : index
    %c0_46 = arith.constant 0 : index
    %82 = vector.load %arg1[%c10, %c0_46] : memref<16x128xf32, #tpu.memory_space<vmem>>, vector<1x128xf32>
    %c1_47 = arith.constant 1 : index
    %c0_48 = arith.constant 0 : index
    %83 = memref.load %arg2[%c1_47, %c0_48] : memref<3x3xf32, #tpu.memory_space<smem>>
    %84 = vector.broadcast %83 : f32 to vector<1x128xf32>
    %85 = arith.mulf %82, %84 : vector<1x128xf32>
    %86 = arith.addf %81, %85 : vector<1x128xf32>
    %c12 = arith.constant 12 : index
    %c0_49 = arith.constant 0 : index
    %87 = vector.load %arg1[%c12, %c0_49] : memref<16x128xf32, #tpu.memory_space<vmem>>, vector<1x128xf32>
    %c0_50 = arith.constant 0 : index
    %c2_51 = arith.constant 2 : index
    %88 = memref.load %arg2[%c0_50, %c2_51] : memref<3x3xf32, #tpu.memory_space<smem>>
    %89 = vector.broadcast %88 : f32 to vector<1x128xf32>
    %90 = arith.mulf %87, %89 : vector<1x128xf32>
    %91 = arith.addf %86, %90 : vector<1x128xf32>
    %c13 = arith.constant 13 : index
    %c0_52 = arith.constant 0 : index
    %92 = vector.load %arg1[%c13, %c0_52] : memref<16x128xf32, #tpu.memory_space<vmem>>, vector<1x128xf32>
    %c0_53 = arith.constant 0 : index
    %c1_54 = arith.constant 1 : index
    %93 = memref.load %arg2[%c0_53, %c1_54] : memref<3x3xf32, #tpu.memory_space<smem>>
    %94 = vector.broadcast %93 : f32 to vector<1x128xf32>
    %95 = arith.mulf %92, %94 : vector<1x128xf32>
    %96 = arith.addf %91, %95 : vector<1x128xf32>
    %c14 = arith.constant 14 : index
    %c0_55 = arith.constant 0 : index
    %97 = vector.load %arg1[%c14, %c0_55] : memref<16x128xf32, #tpu.memory_space<vmem>>, vector<1x128xf32>
    %c0_56 = arith.constant 0 : index
    %c0_57 = arith.constant 0 : index
    %98 = memref.load %arg2[%c0_56, %c0_57] : memref<3x3xf32, #tpu.memory_space<smem>>
    %99 = vector.broadcast %98 : f32 to vector<1x128xf32>
    %100 = arith.mulf %97, %99 : vector<1x128xf32>
    %101 = arith.addf %96, %100 : vector<1x128xf32>
    %102 = vector.broadcast %0 : f32 to vector<1x128xf32>
    %c2_58 = arith.constant 2 : index
    %c2_59 = arith.constant 2 : index
    %103 = memref.load %arg2[%c2_58, %c2_59] : memref<3x3xf32, #tpu.memory_space<smem>>
    %104 = vector.broadcast %103 : f32 to vector<1x128xf32>
    %105 = arith.mulf %22, %104 : vector<1x128xf32>
    %106 = arith.addf %102, %105 : vector<1x128xf32>
    %c2_60 = arith.constant 2 : index
    %c1_61 = arith.constant 1 : index
    %107 = memref.load %arg2[%c2_60, %c1_61] : memref<3x3xf32, #tpu.memory_space<smem>>
    %108 = vector.broadcast %107 : f32 to vector<1x128xf32>
    %109 = arith.mulf %27, %108 : vector<1x128xf32>
    %110 = arith.addf %106, %109 : vector<1x128xf32>
    %c2_62 = arith.constant 2 : index
    %c0_63 = arith.constant 0 : index
    %111 = memref.load %arg2[%c2_62, %c0_63] : memref<3x3xf32, #tpu.memory_space<smem>>
    %112 = vector.broadcast %111 : f32 to vector<1x128xf32>
    %113 = arith.mulf %54, %112 : vector<1x128xf32>
    %114 = arith.addf %110, %113 : vector<1x128xf32>
    %c1_64 = arith.constant 1 : index
    %c2_65 = arith.constant 2 : index
    %115 = memref.load %arg2[%c1_64, %c2_65] : memref<3x3xf32, #tpu.memory_space<smem>>
    %116 = vector.broadcast %115 : f32 to vector<1x128xf32>
    %117 = arith.mulf %77, %116 : vector<1x128xf32>
    %118 = arith.addf %114, %117 : vector<1x128xf32>
    %c1_66 = arith.constant 1 : index
    %c1_67 = arith.constant 1 : index
    %119 = memref.load %arg2[%c1_66, %c1_67] : memref<3x3xf32, #tpu.memory_space<smem>>
    %120 = vector.broadcast %119 : f32 to vector<1x128xf32>
    %121 = arith.mulf %82, %120 : vector<1x128xf32>
    %122 = arith.addf %118, %121 : vector<1x128xf32>
    %c11 = arith.constant 11 : index
    %c0_68 = arith.constant 0 : index
    %123 = vector.load %arg1[%c11, %c0_68] : memref<16x128xf32, #tpu.memory_space<vmem>>, vector<1x128xf32>
    %c1_69 = arith.constant 1 : index
    %c0_70 = arith.constant 0 : index
    %124 = memref.load %arg2[%c1_69, %c0_70] : memref<3x3xf32, #tpu.memory_space<smem>>
    %125 = vector.broadcast %124 : f32 to vector<1x128xf32>
    %126 = arith.mulf %123, %125 : vector<1x128xf32>
    %127 = arith.addf %122, %126 : vector<1x128xf32>
    %c0_71 = arith.constant 0 : index
    %c2_72 = arith.constant 2 : index
    %128 = memref.load %arg2[%c0_71, %c2_72] : memref<3x3xf32, #tpu.memory_space<smem>>
    %129 = vector.broadcast %128 : f32 to vector<1x128xf32>
    %130 = arith.mulf %92, %129 : vector<1x128xf32>
    %131 = arith.addf %127, %130 : vector<1x128xf32>
    %c0_73 = arith.constant 0 : index
    %c1_74 = arith.constant 1 : index
    %132 = memref.load %arg2[%c0_73, %c1_74] : memref<3x3xf32, #tpu.memory_space<smem>>
    %133 = vector.broadcast %132 : f32 to vector<1x128xf32>
    %134 = arith.mulf %97, %133 : vector<1x128xf32>
    %135 = arith.addf %131, %134 : vector<1x128xf32>
    %c15 = arith.constant 15 : index
    %c0_75 = arith.constant 0 : index
    %136 = vector.load %arg1[%c15, %c0_75] : memref<16x128xf32, #tpu.memory_space<vmem>>, vector<1x128xf32>
    %c0_76 = arith.constant 0 : index
    %c0_77 = arith.constant 0 : index
    %137 = memref.load %arg2[%c0_76, %c0_77] : memref<3x3xf32, #tpu.memory_space<smem>>
    %138 = vector.broadcast %137 : f32 to vector<1x128xf32>
    %139 = arith.mulf %136, %138 : vector<1x128xf32>
    %140 = arith.addf %135, %139 : vector<1x128xf32>
    %141 = tpu.concatenate %31, %58, %101, %140 in 0 : vector<1x128xf32>, vector<1x128xf32>, vector<1x128xf32>, vector<1x128xf32> -> vector<4x128xf32>
    %c0_78 = arith.constant 0 : index
    %c0_79 = arith.constant 0 : index
    %142 = vector.load %arg4[%c0_78, %c0_79] : memref<4x128xf32, #tpu.memory_space<vmem>>, vector<4x128xf32>
    tpu.vector_store %arg4[%c0_78, %c0_79], %141 {strides = array<i32>} : memref<4x128xf32, #tpu.memory_space<vmem>>, vector<4x128xf32>,
    return
  }
  func.func @transform_0(%arg0: i32) -> (i32, i32) {
    %c0_i32 = arith.constant 0 : i32
    %c0_i32_0 = arith.constant 0 : i32
    return %c0_i32, %arg0 : i32, i32
  }
  func.func @transform_1(%arg0: i32) -> (i32, i32) {
    %c0_i32 = arith.constant 0 : i32
    %c0_i32_0 = arith.constant 0 : i32
    %c0_i32_1 = arith.constant 0 : i32
    return %c0_i32, %c0_i32_0 : i32, i32
  }
  func.func @transform_2(%arg0: i32) -> (i32, i32) {
    %c0_i32 = arith.constant 0 : i32
    %c0_i32_0 = arith.constant 0 : i32
    %c0_i32_1 = arith.constant 0 : i32
    return %c0_i32, %c0_i32_0 : i32, i32
  }
  func.func @transform_3(%arg0: i32) -> (i32, i32) {
    %c0_i32 = arith.constant 0 : i32
    %c0_i32_0 = arith.constant 0 : i32
    return %c0_i32, %arg0 : i32, i32
  }
}

</mosaic_0001>

<llo_original>
// kernel: model_forward.1
$region0: #{model_forward.1}
  #allocation0 [shape = 'u32[]', space=smem, size = 0x4, offset = 0x4, fixed_abs, tag = 'smem constant byte address 0x4 - core index']
  #allocation1 [shape = 'u32[144,128]{1,0:T(1,128)}', space=vmem, size = 0x12000, scoped, tag = 'internal scratch']
  #allocation2 [shape = 'f32[1,1]{1,0:T(1,128)S(6)}', space=smem, size = 0x200, scoped, tag = 'scoped memory for model_forward.1']
  %s0 = inlined_call_operand.vmem [shape: f32[16,128], index: 0, kind: input, shape index: {}]
  %s1 = inlined_call_operand.vmem [shape: f32[3,3], index: 1, kind: input, shape index: {}]
  %s2 = inlined_call_operand.<no memory space> [shape: f32[1,1], index: 2, kind: input, shape index: {}]
  %s3 = inlined_call_operand.vmem [shape: f32[4,128], index: 3, kind: output, shape index: {}]
  %s4 = sld [smem:[#allocation0]]
  $region26: #{model_forward.1} parent=0
    _
  %s6 = ssub.s32 1, %s4
  %s7 = scalar_select 0, %s6, %s4
  %8 = sst [smem:[#allocation2]] %s2
  $region1: #{model_forward.1} parent=0
    #allocation3 [shape = 'u8[2048]{0}', space=smem, size = 0x800, scoped, tag = 'input window, operand 1, single buffered']
    #allocation4 [shape = 's32[1]{0}', space=sflag, size = 0x4, scoped, tag = 'scoped memory for model_forward.1']
    %9 = vsyncpa [#allocation4], 0
    // Predicated region
    $region2: #{model_forward.1} parent=1 // pred_check
      _
    $region3: #{model_forward.1} parent=1 // pred_check_branch
      %11 = sbr.rel (0) target = $region5
    $region4: #{model_forward.1} parent=1 // pred_region
      _
    $region5: #{model_forward.1} parent=1 // pred_fallthru
      _
    // Predicated region
    $region6: #{model_forward.1} parent=1 // pred_check
      _
    $region7: #{model_forward.1} parent=1 // pred_check_branch
      %13 = sbr.rel (0) target = $region9
    $region8: #{model_forward.1} parent=1 // pred_region
      %s15 = ssub.s32 64, 64
      %16 = vsyncadd [#allocation4], %s15
      %s18 = sshll.u32 %s1, 4
      %s19 = int_to_ptr.vmem [resolvable:$true] %s18
      %21 = dma.vmem_to_smem %s19, 64, [#allocation3], [#allocation4]
    $region9: #{model_forward.1} parent=1 // pred_fallthru
      _
    // Predicated region
    $region10: #{model_forward.1} parent=1 // pred_check
      _
    $region11: #{model_forward.1} parent=1 // pred_check_branch
      %23 = sbr.rel (0) target = $region13
    $region12: #{model_forward.1} parent=1 // pred_region
      _
    $region13: #{model_forward.1} parent=1 // pred_fallthru
      _
    // Predicated region
    $region14: #{model_forward.1} parent=1 // pred_check
      _
    $region15: #{model_forward.1} parent=1 // pred_check_branch
      %25 = sbr.rel (0) target = $region17
    $region16: #{model_forward.1} parent=1 // pred_region
      %26 = dma.done [#allocation4], 64
    $region17: #{model_forward.1} parent=1 // pred_fallthru
      _
    %27 = sfence
    %s28 = sld [smem:[#allocation2]]
    %v29 = vstv %s28
    %v30 = vld [vmem:[%s0] sm:$0x1]
    %s31 = sld [smem:[#allocation3 + $0x82]]
    %v32 = vstv %s31
    %v33 = vmul.f32 %v30, %v32
    %v34 = vadd.f32 %v29, %v33
    %v35 = vld [vmem:[%s0 + $0x1] sm:$0x1]
    %s36 = sld [smem:[#allocation3 + $0x81]]
    %v37 = vstv %s36
    %v38 = vmul.f32 %v35, %v37
    %v39 = vadd.f32 %v34, %v38
    %v40 = vld [vmem:[%s0 + $0x2] sm:$0x1]
    %s41 = sld [smem:[#allocation3 + $0x80]]
    %v42 = vstv %s41
    %v43 = vmul.f32 %v40, %v42
    %v44 = vadd.f32 %v39, %v43
    %v45 = vld [vmem:[%s0 + $0x4] sm:$0x1]
    %s46 = sld [smem:[#allocation3 + $0x2]]
    %v47 = vstv %s46
    %v48 = vmul.f32 %v45, %v47
    %v49 = vadd.f32 %v44, %v48
    %v50 = vld [vmem:[%s0 + $0x5] sm:$0x1]
    %s51 = sld [smem:[#allocation3 + $0x1]]
    %v52 = vstv %s51
    %v53 = vmul.f32 %v50, %v52
    %v54 = vadd.f32 %v49, %v53
    %v55 = vld [vmem:[%s0 + $0x6] sm:$0x1]
    %s56 = sld [smem:[#allocation3]]
    %v57 = vstv %s56
    %v58 = vmul.f32 %v55, %v57
    %v59 = vadd.f32 %v54, %v58
    %v60 = vmul.f32 %v35, %v32
    %v61 = vadd.f32 %v29, %v60
    %v62 = vmul.f32 %v40, %v37
    %v63 = vadd.f32 %v61, %v62
    %v64 = vld [vmem:[%s0 + $0x3] sm:$0x1]
    %v65 = vmul.f32 %v64, %v42
    %v66 = vadd.f32 %v63, %v65
    %v67 = vmul.f32 %v50, %v47
    %v68 = vadd.f32 %v66, %v67
    %v69 = vmul.f32 %v55, %v52
    %v70 = vadd.f32 %v68, %v69
    %v71 = vld [vmem:[%s0 + $0x7] sm:$0x1]
    %v72 = vmul.f32 %v71, %v57
    %v73 = vadd.f32 %v70, %v72
    %s74 = sld [smem:[#allocation3 + $0x102]]
    %v75 = vstv %s74
    %v76 = vmul.f32 %v45, %v75
    %v77 = vadd.f32 %v29, %v76
    %s78 = sld [smem:[#allocation3 + $0x101]]
    %v79 = vstv %s78
    %v80 = vmul.f32 %v50, %v79
    %v81 = vadd.f32 %v77, %v80
    %s82 = sld [smem:[#allocation3 + $0x100]]
    %v83 = vstv %s82
    %v84 = vmul.f32 %v55, %v83
    %v85 = vadd.f32 %v81, %v84
    %v86 = vld [vmem:[%s0 + $0x8] sm:$0x1]
    %v87 = vmul.f32 %v86, %v32
    %v88 = vadd.f32 %v85, %v87
    %v89 = vld [vmem:[%s0 + $0x9] sm:$0x1]
    %v90 = vmul.f32 %v89, %v37
    %v91 = vadd.f32 %v88, %v90
    %v92 = vld [vmem:[%s0 + $0xa] sm:$0x1]
    %v93 = vmul.f32 %v92, %v42
    %v94 = vadd.f32 %v91, %v93
    %v95 = vld [vmem:[%s0 + $0xc] sm:$0x1]
    %v96 = vmul.f32 %v95, %v47
    %v97 = vadd.f32 %v94, %v96
    %v98 = vld [vmem:[%s0 + $0xd] sm:$0x1]
    %v99 = vmul.f32 %v98, %v52
    %v100 = vadd.f32 %v97, %v99
    %v101 = vld [vmem:[%s0 + $0xe] sm:$0x1]
    %v102 = vmul.f32 %v101, %v57
    %v103 = vadd.f32 %v100, %v102
    %v104 = vmul.f32 %v50, %v75
    %v105 = vadd.f32 %v29, %v104
    %v106 = vmul.f32 %v55, %v79
    %v107 = vadd.f32 %v105, %v106
    %v108 = vmul.f32 %v71, %v83
    %v109 = vadd.f32 %v107, %v108
    %v110 = vmul.f32 %v89, %v32
    %v111 = vadd.f32 %v109, %v110
    %v112 = vmul.f32 %v92, %v37
    %v113 = vadd.f32 %v111, %v112
    %v114 = vld [vmem:[%s0 + $0xb] sm:$0x1]
    %v115 = vmul.f32 %v114, %v42
    %v116 = vadd.f32 %v113, %v115
    %v117 = vmul.f32 %v98, %v47
    %v118 = vadd.f32 %v116, %v117
    %v119 = vmul.f32 %v101, %v52
    %v120 = vadd.f32 %v118, %v119
    %v121 = vld [vmem:[%s0 + $0xf] sm:$0x1]
    %v122 = vmul.f32 %v121, %v57
    %v123 = vadd.f32 %v120, %v122
    %v125 = vrot.slane %v73, 7
    %v128 = vrot.slane %v103, 6
    %v131 = vrot.slane %v123, 5
    %vm133 = vcmask 1040384
    %v134 = vsel %vm133, %v59, %v125
    %vm135 = vcmask 1041408
    %v136 = vsel %vm135, %v134, %v128
    %vm137 = vcmask 1042432
    %v138 = vsel %vm137, %v136, %v131
    %139 = vst [vmem:[%s3] sm:$0xf] %v138
    // Predicated region
    $region18: #{model_forward.1} parent=1 // pred_check
      _
    $region19: #{model_forward.1} parent=1 // pred_check_branch
      %141 = sbr.rel (0) target = $region21
    $region20: #{model_forward.1} parent=1 // pred_region
      _
    $region21: #{model_forward.1} parent=1 // pred_fallthru
      _
    // Predicated region
    $region22: #{model_forward.1} parent=1 // pred_check
      _
    $region23: #{model_forward.1} parent=1 // pred_check_branch
      %143 = sbr.rel (0) target = $region25
    $region24: #{model_forward.1} parent=1 // pred_region
      _
    $region25: #{model_forward.1} parent=1 // pred_fallthru
      _
    %144 = vsyncpa [#allocation4], 1

</llo_original>
